<compile_context>
chip_gen: v7x
topology: tpu7x:2x2x1
jax: 0.10.0
libtpu: 0.0.40
codegen_flags: <defaults>
</compile_context>

<pallas_src>
import functools

import jax
import jax.numpy as jnp
from jax import lax
from jax.experimental import pallas as pl
from jax.experimental.pallas import tpu as pltpu

BN_EPS = 1e-5  # PyTorch BatchNorm1d default


def _round_up(x, m):
    return (x + m - 1) // m * m


def _sublane_multiple(dtype):
    # sub-32-bit dtypes pack rows along sublanes: 8 (f32) / 16 (bf16) / 32 (i8)
    return max(8, 32 // jnp.dtype(dtype).itemsize)


def _vmem_budget_bytes():
    # ~96 MiB on 128-MiB parts (v5e/v6e), ~48 MiB on 64-MiB parts (v7x).
    try:
        cap = pltpu.get_tpu_info().vmem_capacity_bytes
    except Exception:
        cap = 64 * 1024 * 1024  # conservative fallback, valid on every gen
    return min(int(cap * 0.75), 100 * 1024 * 1024)


# ---------------------------------------------------------------------------
# Fused single-call path: h stays resident in the output's VMEM buffer
# ---------------------------------------------------------------------------
def _fused_kernel(x_ref, w_ref, gamma_ref, beta_ref, o_ref, colsum_ref,
                  *, tn, grid_n, n_rows, pad_rows):
    i = pl.program_id(0)

    @pl.when(i == 0)
    def _():
        colsum_ref[...] = jnp.zeros_like(colsum_ref)

    x = x_ref[...]                                            # [tn, in]
    w = w_ref[...]                                            # [in, hid_p]
    h = jnp.dot(x, w, preferred_element_type=jnp.float32)     # MXU, f32 acc

    row0 = pl.multiple_of(i * tn, tn)
    o_ref[pl.ds(row0, tn), :] = h.astype(o_ref.dtype)         # park h (VMEM resident)

    # per-column batch sum of x (tiny XLU reduce); sum(h) = colsum(x) @ W later
    colsum_ref[...] += jnp.sum(x.astype(jnp.float32), axis=0, keepdims=True)

    @pl.when(i == grid_n - 1)
    def _():
        inv_n = 1.0 / n_rows
        w32 = w.astype(jnp.float32)
        mean = jnp.dot(colsum_ref[...], w32,
                       preferred_element_type=jnp.float32) * inv_n      # [1, hid_p]

        # centered variance from the resident h (well conditioned for large means)
        def var_body(t, acc):
            r0 = pl.multiple_of(t * tn, tn)
            d = o_ref[pl.ds(r0, tn), :].astype(jnp.float32) - mean
            return acc + jnp.sum(d * d, axis=0, keepdims=True)

        css = lax.fori_loop(0, grid_n, var_body, jnp.zeros_like(mean))
        # zero-padded batch rows each contributed mean^2; remove, then biased /N
        var = jnp.maximum((css - float(pad_rows) * mean * mean) * inv_n, 0.0)
        scale = gamma_ref[...] * lax.rsqrt(var + BN_EPS)                 # EUP rsqrt
        shift = beta_ref[...] - mean * scale

        def norm_body(t, carry):
            r0 = pl.multiple_of(t * tn, tn)
            hb = o_ref[pl.ds(r0, tn), :].astype(jnp.float32)
            o_ref[pl.ds(r0, tn), :] = (hb * scale + shift).astype(o_ref.dtype)
            return carry

        lax.fori_loop(0, grid_n, norm_body, 0)


# ---------------------------------------------------------------------------
# Fallback two-pass path (h never written to HBM; pass 2 recomputes x @ W)
# ---------------------------------------------------------------------------
def _stats_kernel(x_ref, w_ref, gamma_ref, beta_ref, scale_ref, shift_ref,
                  colsum_ref, sumsq_ref, *, grid_n, n_rows):
    i = pl.program_id(0)

    @pl.when(i == 0)
    def _():
        colsum_ref[...] = jnp.zeros_like(colsum_ref)
        sumsq_ref[...] = jnp.zeros_like(sumsq_ref)

    x = x_ref[...]
    w = w_ref[...]
    h = jnp.dot(x, w, preferred_element_type=jnp.float32)
    colsum_ref[...] += jnp.sum(x.astype(jnp.float32), axis=0, keepdims=True)
    sumsq_ref[...] += jnp.sum(h * h, axis=0, keepdims=True)   # XLU, keeps MXU free

    @pl.when(i == grid_n - 1)
    def _():
        inv_n = 1.0 / n_rows
        mean = jnp.dot(colsum_ref[...], w.astype(jnp.float32),
                       preferred_element_type=jnp.float32) * inv_n
        # E[h^2] - mean^2 (h is not resident here); fused path uses centered form
        var = jnp.maximum(sumsq_ref[...] * inv_n - mean * mean, 0.0)
        scale = gamma_ref[...] * lax.rsqrt(var + BN_EPS)
        scale_ref[...] = scale
        shift_ref[...] = beta_ref[...] - mean * scale


def _apply_kernel(x_ref, w_ref, scale_ref, shift_ref, o_ref):
    h = jnp.dot(x_ref[...], w_ref[...], preferred_element_type=jnp.float32)
    o_ref[...] = (h * scale_ref[...] + shift_ref[...]).astype(o_ref.dtype)


# ---------------------------------------------------------------------------
# Init-time parameter packing (done once, not per call)
# ---------------------------------------------------------------------------
def prepare_params(w, gamma, beta):
    """w: nn.Linear weight [out, in].  Pads the hidden dim to a multiple of 128
    (lane-dense stores) and pre-transposes W to [in, hid_p] once at init."""
    out_size, in_size = w.shape
    hid_p = _round_up(out_size, 128)
    w_t = jnp.asarray(w).T                                   # [in, out]
    if hid_p != out_size:
        w_t = jnp.zeros((in_size, hid_p), w.dtype).at[:, :out_size].set(w_t)
    f32 = jnp.float32
    gamma_p = jnp.ones((1, hid_p), f32).at[0, :out_size].set(gamma.astype(f32))
    beta_p = jnp.zeros((1, hid_p), f32).at[0, :out_size].set(beta.astype(f32))
    return {"w": w_t, "gamma": gamma_p, "beta": beta_p, "out_size": out_size}


# ---------------------------------------------------------------------------
# Forward wrapper
# ---------------------------------------------------------------------------
def linear_bn_forward(x, params, g=None):
    """Linear (no bias) + BatchNorm1d with training-mode batch statistics.
    `g` (the graph argument of the PyTorch forward) is unused."""
    del g
    w_p, gamma_p, beta_p = params["w"], params["gamma"], params["beta"]
    out_size = params["out_size"]
    n, in_size = x.shape
    assert w_p.shape[0] == in_size
    hid_p = w_p.shape[1]

    out_dtype = x.dtype
    xb = jnp.dtype(x.dtype).itemsize
    ob = jnp.dtype(out_dtype).itemsize
    wb = jnp.dtype(w_p.dtype).itemsize
    sub = _sublane_multiple(x.dtype)
    budget = _vmem_budget_bytes()
    w_bytes = w_p.size * wb

    # rows per grid step: as large as the budget allows (fewer, larger DMAs)
    denom = 2 * in_size * xb + 2 * hid_p * ob
    avail = max(budget // 2 - 2 * w_bytes, sub * denom)
    tn_cap = min(avail // denom, 1024)
    tn_cap = max(sub, tn_cap - (tn_cap % sub))
    if n <= tn_cap:
        tn, n_p = n, n                      # single tile, no row padding
    else:
        tn = tn_cap
        n_p = _round_up(n, tn)
    grid_n = n_p // tn
    pad_rows = n_p - n

    x_p = x
    if n_p != n:                            # pad only when actually needed
        x_p = jnp.zeros((n_p, in_size), x.dtype).at[:n, :].set(x)

    # fused single-call path if the whole (padded) output fits the VMEM budget
    fused_bytes = (n_p * hid_p * ob             # resident output (holds h)
                   + 2 * tn * in_size * xb      # double-buffered x tiles
                   + 2 * w_bytes                # W (default double-buffered)
                   + 2 * hid_p * 4 + 4096)      # gamma/beta + slack
    use_fused = fused_bytes <= int(budget * 0.8)

    cparams_red = pltpu.CompilerParams(
        dimension_semantics=("arbitrary",), vmem_limit_bytes=budget)

    if use_fused:
        out_p = pl.pallas_call(
            functools.partial(_fused_kernel, tn=tn, grid_n=grid_n,
                              n_rows=n, pad_rows=pad_rows),
            out_shape=jax.ShapeDtypeStruct((n_p, hid_p), out_dtype),
            grid_spec=pltpu.PrefetchScalarGridSpec(
                num_scalar_prefetch=0,
                grid=(grid_n,),
                in_specs=[
                    pl.BlockSpec((tn, in_size), lambda i: (i, 0)),
                    # constant index map -> W stays resident (a Buffered(1)
                    # pipeline mode would additionally drop its 2nd buffer)
                    pl.BlockSpec((in_size, hid_p), lambda i: (0, 0)),
                    pl.BlockSpec((1, hid_p), lambda i: (0, 0)),
                    pl.BlockSpec((1, hid_p), lambda i: (0, 0)),
                ],
                out_specs=pl.BlockSpec((n_p, hid_p), lambda i: (0, 0)),
                scratch_shapes=[pltpu.VMEM((1, in_size), jnp.float32)],
            ),
            compiler_params=cparams_red,
        )(x_p, w_p, gamma_p, beta_p)
    else:
        # ---- pass 1: batch statistics -> scale/shift (h never hits HBM) ----
        scale, shift = pl.pallas_call(
            functools.partial(_stats_kernel, grid_n=grid_n, n_rows=n),
            out_shape=(jax.ShapeDtypeStruct((1, hid_p), jnp.float32),
                       jax.ShapeDtypeStruct((1, hid_p), jnp.float32)),
            grid_spec=pltpu.PrefetchScalarGridSpec(
                num_scalar_prefetch=0,
                grid=(grid_n,),
                in_specs=[
                    pl.BlockSpec((tn, in_size), lambda i: (i, 0)),
                    pl.BlockSpec((in_size, hid_p), lambda i: (0, 0)),
                    pl.BlockSpec((1, hid_p), lambda i: (0, 0)),
                    pl.BlockSpec((1, hid_p), lambda i: (0, 0)),
                ],
                out_specs=(pl.BlockSpec((1, hid_p), lambda i: (0, 0)),
                           pl.BlockSpec((1, hid_p), lambda i: (0, 0))),
                scratch_shapes=[pltpu.VMEM((1, in_size), jnp.float32),
                                pltpu.VMEM((1, hid_p), jnp.float32)],
            ),
            compiler_params=cparams_red,
        )(x_p, w_p, gamma_p, beta_p)

        # ---- pass 2: recompute h = x @ W per tile and apply the affine ----
        out_p = pl.pallas_call(
            _apply_kernel,
            out_shape=jax.ShapeDtypeStruct((n_p, hid_p), out_dtype),
            grid_spec=pltpu.PrefetchScalarGridSpec(
                num_scalar_prefetch=0,
                grid=(grid_n,),
                in_specs=[
                    pl.BlockSpec((tn, in_size), lambda i: (i, 0)),
                    pl.BlockSpec((in_size, hid_p), lambda i: (0, 0)),
                    pl.BlockSpec((1, hid_p), lambda i: (0, 0)),
                    pl.BlockSpec((1, hid_p), lambda i: (0, 0)),
                ],
                out_specs=pl.BlockSpec((tn, hid_p), lambda i: (i, 0)),
            ),
            compiler_params=pltpu.CompilerParams(
                dimension_semantics=("parallel",), vmem_limit_bytes=budget),
        )(x_p, w_p, scale, shift)

    if n_p != n or hid_p != out_size:       # slice only when padding was added
        out_p = out_p[:n, :out_size]
    return out_p


if __name__ == "__main__":
    # Small shapes consistent with Linear_BN: batch=8, in_size=16, out_size=32.
    N, IN, OUT = 8, 16, 32

    key = jax.random.PRNGKey(0)
    kx, kw, kg, kb = jax.random.split(key, 4)

    x = jax.random.normal(kx, (N, IN), dtype=jnp.float32)
    # nn.Linear weight W is [OUT, IN]; packed/transposed once at init below.
    w = jax.random.uniform(kw, (OUT, IN), dtype=jnp.float32,
                           minval=-1.0, maxval=1.0) * (1.0 / (IN ** 0.5))
    gamma = jax.random.uniform(kg, (OUT,), dtype=jnp.float32, minval=0.5, maxval=1.5)
    beta = jax.random.normal(kb, (OUT,), dtype=jnp.float32) * 0.1

    params = prepare_params(w, gamma, beta)        # init-time pad/transpose (once)
    out = linear_bn_forward(x, params)             # graph arg `g` is unused
    jax.block_until_ready(out)

    # Pure-JAX reference (PyTorch train-mode BN: batch stats, biased var, eps=1e-5).
    h = x @ w.T
    mu = h.mean(axis=0, keepdims=True)
    var = ((h - mu) ** 2).mean(axis=0, keepdims=True)
    ref = (h - mu) / jnp.sqrt(var + BN_EPS) * gamma + beta

    assert out.shape == (N, OUT)
    assert out.dtype == x.dtype
    err = float(jnp.max(jnp.abs(out - ref)))
    assert jnp.allclose(out, ref, atol=1e-4, rtol=1e-4), err

    print("KERNEL_OK")
</pallas_src>

<mosaic_0001>
module attributes {stable_mosaic.version = 11 : i64} {
  func.func @_fused_kernel(%arg0: i32, %arg1: memref<8x16xf32, #tpu.memory_space<vmem>>, %arg2: memref<16x128xf32, #tpu.memory_space<vmem>>, %arg3: memref<1x128xf32, #tpu.memory_space<vmem>>, %arg4: memref<1x128xf32, #tpu.memory_space<vmem>>, %arg5: memref<8x128xf32, #tpu.memory_space<vmem>>, %arg6: memref<1x16xf32, #tpu.memory_space<vmem>>) attributes {dimension_semantics = [#tpu.dimension_semantics<arbitrary>], iteration_bounds = array<i64: 1>, scalar_prefetch = 0 : i64, scratch_operands = 1 : i64, tpu.core_type = #tpu.core_type<tc>, window_params = [{transform_indices = @transform_0, window_bounds = array<i64: 8, 16>}, {pipeline_mode = #tpu.pipeline_mode<synchronous>, transform_indices = @transform_1, window_bounds = array<i64: 16, 128>}, {pipeline_mode = #tpu.pipeline_mode<synchronous>, transform_indices = @transform_2, window_bounds = array<i64: 1, 128>}, {pipeline_mode = #tpu.pipeline_mode<synchronous>, transform_indices = @transform_3, window_bounds = array<i64: 1, 128>}, {pipeline_mode = #tpu.pipeline_mode<synchronous>, transform_indices = @transform_4, window_bounds = array<i64: 8, 128>}]} {
    %c0_i32 = arith.constant 0 : i32
    %0 = arith.cmpi eq, %arg0, %c0_i32 : i32
    %1 = arith.extui %0 : i1 to i32
    %c0_i32_0 = arith.constant 0 : i32
    %2 = arith.cmpi ne, %1, %c0_i32_0 : i32
    scf.if %2 {
      %cst_12 = arith.constant 0.000000e+00 : f32
      %18 = vector.broadcast %cst_12 : f32 to vector<1x16xf32>
      %c0_13 = arith.constant 0 : index
      %c0_14 = arith.constant 0 : index
      %19 = vector.load %arg6[%c0_13, %c0_14] : memref<1x16xf32, #tpu.memory_space<vmem>>, vector<1x16xf32>
      tpu.vector_store %arg6[%c0_13, %c0_14], %18 {strides = array<i32>} : memref<1x16xf32, #tpu.memory_space<vmem>>, vector<1x16xf32>,
    } else {
    }
    %c0 = arith.constant 0 : index
    %c0_1 = arith.constant 0 : index
    %3 = vector.load %arg1[%c0, %c0_1] : memref<8x16xf32, #tpu.memory_space<vmem>>, vector<8x16xf32>
    %c0_2 = arith.constant 0 : index
    %c0_3 = arith.constant 0 : index
    %4 = vector.load %arg2[%c0_2, %c0_3] : memref<16x128xf32, #tpu.memory_space<vmem>>, vector<16x128xf32>
    %cst = arith.constant dense<0.000000e+00> : vector<8x128xf32>
    %5 = tpu.matmul %3, %4, %cst {dimension_numbers = #tpu.dot_dimension_numbers<[1], [0], [0], [1], [0, 0, 1, 1], [], []>} : vector<8x16xf32>, vector<16x128xf32>, vector<8x128xf32> -> vector<8x128xf32>
    %c8_i32 = arith.constant 8 : i32
    %6 = arith.muli %arg0, %c8_i32 : i32
    %7 = tpu.assume_multiple %6, 8 : i32
    %8 = arith.index_cast %7 : i32 to index
    %c0_4 = arith.constant 0 : index
    %9 = vector.load %arg5[%8, %c0_4] : memref<8x128xf32, #tpu.memory_space<vmem>>, vector<8x128xf32>
    tpu.vector_store %arg5[%8, %c0_4], %5 {strides = array<i32>} : memref<8x128xf32, #tpu.memory_space<vmem>>, vector<8x128xf32>,
    %c0_5 = arith.constant 0 : index
    %c0_6 = arith.constant 0 : index
    %10 = vector.load %arg6[%c0_5, %c0_6] : memref<1x16xf32, #tpu.memory_space<vmem>>, vector<1x16xf32>
    %cst_7 = arith.constant dense<0.000000e+00> : vector<16xf32>
    %11 = vector.multi_reduction <add>, %3, %cst_7 [0] : vector<8x16xf32> to vector<16xf32>
    %12 = vector.shape_cast %11 : vector<16xf32> to vector<1x16xf32>
    %13 = arith.addf %10, %12 : vector<1x16xf32>
    %c0_8 = arith.constant 0 : index
    %c0_9 = arith.constant 0 : index
    %14 = vector.load %arg6[%c0_8, %c0_9] : memref<1x16xf32, #tpu.memory_space<vmem>>, vector<1x16xf32>
    tpu.vector_store %arg6[%c0_8, %c0_9], %13 {strides = array<i32>} : memref<1x16xf32, #tpu.memory_space<vmem>>, vector<1x16xf32>,
    %c0_i32_10 = arith.constant 0 : i32
    %15 = arith.cmpi eq, %arg0, %c0_i32_10 : i32
    %16 = arith.extui %15 : i1 to i32
    %c0_i32_11 = arith.constant 0 : i32
    %17 = arith.cmpi ne, %16, %c0_i32_11 : i32
    scf.if %17 {
      %c0_12 = arith.constant 0 : index
      %c0_13 = arith.constant 0 : index
      %18 = vector.load %arg6[%c0_12, %c0_13] : memref<1x16xf32, #tpu.memory_space<vmem>>, vector<1x16xf32>
      %cst_14 = arith.constant dense<0.000000e+00> : vector<1x128xf32>
      %19 = tpu.matmul %18, %4, %cst_14 {dimension_numbers = #tpu.dot_dimension_numbers<[1], [0], [0], [1], [0, 0, 1, 1], [], []>} : vector<1x16xf32>, vector<16x128xf32>, vector<1x128xf32> -> vector<1x128xf32>
      %cst_15 = arith.constant 1.250000e-01 : f32
      %20 = vector.broadcast %cst_15 : f32 to vector<1x128xf32>
      %21 = arith.mulf %19, %20 : vector<1x128xf32>
      %cst_16 = arith.constant 0.000000e+00 : f32
      %22 = vector.broadcast %cst_16 : f32 to vector<1x128xf32>
      %c0_i32_17 = arith.constant 0 : i32
      %c8_i32_18 = arith.constant 8 : i32
      %23 = arith.muli %c0_i32_17, %c8_i32_18 : i32
      %24 = tpu.assume_multiple %23, 8 : i32
      %25 = arith.index_cast %24 : i32 to index
      %c0_19 = arith.constant 0 : index
      %26 = vector.load %arg5[%25, %c0_19] : memref<8x128xf32, #tpu.memory_space<vmem>>, vector<8x128xf32>
      %27 = vector.broadcast %21 : vector<1x128xf32> to vector<8x128xf32>
      %28 = arith.subf %26, %27 : vector<8x128xf32>
      %29 = arith.mulf %28, %28 : vector<8x128xf32>
      %cst_20 = arith.constant dense<0.000000e+00> : vector<128xf32>
      %30 = vector.multi_reduction <add>, %29, %cst_20 [0] : vector<8x128xf32> to vector<128xf32>
      %31 = vector.shape_cast %30 : vector<128xf32> to vector<1x128xf32>
      %32 = arith.addf %22, %31 : vector<1x128xf32>
      %c1_i32 = arith.constant 1 : i32
      %cst_21 = arith.constant 0.000000e+00 : f32
      %33 = vector.broadcast %cst_21 : f32 to vector<1x128xf32>
      %34 = arith.mulf %33, %21 : vector<1x128xf32>
      %35 = arith.mulf %34, %21 : vector<1x128xf32>
      %36 = arith.subf %32, %35 : vector<1x128xf32>
      %cst_22 = arith.constant 1.250000e-01 : f32
      %37 = vector.broadcast %cst_22 : f32 to vector<1x128xf32>
      %38 = arith.mulf %36, %37 : vector<1x128xf32>
      %cst_23 = arith.constant 0.000000e+00 : f32
      %39 = vector.broadcast %cst_23 : f32 to vector<1x128xf32>
      %40 = arith.maximumf %38, %39 : vector<1x128xf32>
      %c0_24 = arith.constant 0 : index
      %c0_25 = arith.constant 0 : index
      %41 = vector.load %arg3[%c0_24, %c0_25] : memref<1x128xf32, #tpu.memory_space<vmem>>, vector<1x128xf32>
      %cst_26 = arith.constant 9.99999974E-6 : f32
      %42 = vector.broadcast %cst_26 : f32 to vector<1x128xf32>
      %43 = arith.addf %40, %42 : vector<1x128xf32>
      %44 = math.rsqrt %43 : vector<1x128xf32>
      %45 = arith.mulf %41, %44 : vector<1x128xf32>
      %c0_27 = arith.constant 0 : index
      %c0_28 = arith.constant 0 : index
      %46 = vector.load %arg4[%c0_27, %c0_28] : memref<1x128xf32, #tpu.memory_space<vmem>>, vector<1x128xf32>
      %47 = arith.mulf %21, %45 : vector<1x128xf32>
      %48 = arith.subf %46, %47 : vector<1x128xf32>
      %c0_i32_29 = arith.constant 0 : i32
      %c8_i32_30 = arith.constant 8 : i32
      %49 = arith.muli %c0_i32_29, %c8_i32_30 : i32
      %50 = tpu.assume_multiple %49, 8 : i32
      %51 = arith.index_cast %50 : i32 to index
      %c0_31 = arith.constant 0 : index
      %52 = vector.load %arg5[%51, %c0_31] : memref<8x128xf32, #tpu.memory_space<vmem>>, vector<8x128xf32>
      %53 = vector.broadcast %45 : vector<1x128xf32> to vector<8x128xf32>
      %54 = arith.mulf %52, %53 : vector<8x128xf32>
      %55 = vector.broadcast %48 : vector<1x128xf32> to vector<8x128xf32>
      %56 = arith.addf %54, %55 : vector<8x128xf32>
      %57 = arith.index_cast %50 : i32 to index
      %c0_32 = arith.constant 0 : index
      %58 = vector.load %arg5[%57, %c0_32] : memref<8x128xf32, #tpu.memory_space<vmem>>, vector<8x128xf32>
      tpu.vector_store %arg5[%57, %c0_32], %56 {strides = array<i32>} : memref<8x128xf32, #tpu.memory_space<vmem>>, vector<8x128xf32>,
      %c1_i32_33 = arith.constant 1 : i32
    } else {
    }
    return
  }
  func.func @transform_0(%arg0: i32) -> (i32, i32) {
    %c0_i32 = arith.constant 0 : i32
    %c0_i32_0 = arith.constant 0 : i32
    return %arg0, %c0_i32 : i32, i32
  }
  func.func @transform_1(%arg0: i32) -> (i32, i32) {
    %c0_i32 = arith.constant 0 : i32
    %c0_i32_0 = arith.constant 0 : i32
    %c0_i32_1 = arith.constant 0 : i32
    return %c0_i32, %c0_i32_0 : i32, i32
  }
  func.func @transform_2(%arg0: i32) -> (i32, i32) {
    %c0_i32 = arith.constant 0 : i32
    %c0_i32_0 = arith.constant 0 : i32
    %c0_i32_1 = arith.constant 0 : i32
    return %c0_i32, %c0_i32_0 : i32, i32
  }
  func.func @transform_3(%arg0: i32) -> (i32, i32) {
    %c0_i32 = arith.constant 0 : i32
    %c0_i32_0 = arith.constant 0 : i32
    %c0_i32_1 = arith.constant 0 : i32
    return %c0_i32, %c0_i32_0 : i32, i32
  }
  func.func @transform_4(%arg0: i32) -> (i32, i32) {
    %c0_i32 = arith.constant 0 : i32
    %c0_i32_0 = arith.constant 0 : i32
    %c0_i32_1 = arith.constant 0 : i32
    return %c0_i32, %c0_i32_0 : i32, i32
  }
}

</mosaic_0001>

<llo_original>
// kernel: tpu_custom_call.1
$region0: #{tpu_custom_call.1}
  #allocation0 [shape = 'u32[]', space=smem, size = 0x4, offset = 0x4, fixed_abs, tag = 'smem constant byte address 0x4 - core index']
  #allocation1 [shape = 'u32[144,128]{1,0:T(1,128)}', space=vmem, size = 0x12000, scoped, tag = 'internal scratch']
  #allocation2 [shape = 'f32[1,16]{1,0:T(1,128)}', space=vmem, size = 0x200, scoped, tag = 'scratch operand']
  %s0 = inlined_call_operand.hbm [shape: f32[8,16], index: 0, kind: input, shape index: {}]
  %s1 = inlined_call_operand.hbm [shape: f32[16,128], index: 1, kind: input, shape index: {}]
  %s2 = inlined_call_operand.vmem [shape: f32[1,128], index: 2, kind: input, shape index: {}]
  %s3 = inlined_call_operand.vmem [shape: f32[1,128], index: 3, kind: input, shape index: {}]
  %s4 = inlined_call_operand.hbm [shape: f32[8,128], index: 4, kind: output, shape index: {}]
  %s5 = sld [smem:[#allocation0]]
  $region42: #{tpu_custom_call.1} parent=0
    _
  %s7 = ssub.s32 1, %s5
  %s8 = scalar_select 0, %s7, %s5
  $region1: #{tpu_custom_call.1} parent=0
    #allocation3 [shape = 'u8[4096]{0}', space=vmem, size = 0x1000, scoped, tag = 'input window, operand 0, single buffered']
    #allocation4 [shape = 's32[1]{0}', space=sflag, size = 0x4, scoped, tag = 'scoped memory for tpu_custom_call.1']
    #allocation5 [shape = 's32[1]{0}', space=sflag, size = 0x4, scoped, tag = 'scoped memory for tpu_custom_call.1']
    #allocation6 [shape = 'u8[8192]{0}', space=vmem, size = 0x2000, scoped, tag = 'input window, operand 1, single buffered']
    #allocation7 [shape = 's32[1]{0}', space=sflag, size = 0x4, scoped, tag = 'scoped memory for tpu_custom_call.1']
    #allocation8 [shape = 'u8[4096]{0}', space=vmem, size = 0x1000, scoped, tag = 'output window, operand 0, single buffered']
    %9 = vsyncpa [#allocation4], 0
    %10 = vsyncpa [#allocation7], 0
    %11 = vsyncpa [#allocation5], 0
    // Predicated region
    $region2: #{tpu_custom_call.1} parent=1 // pred_check
      _
    $region3: #{tpu_custom_call.1} parent=1 // pred_check_branch
      %13 = sbr.rel (0) target = $region5
    $region4: #{tpu_custom_call.1} parent=1 // pred_region
      %s15 = ssub.s32 128, 128
      %16 = vsyncadd [#allocation4], %s15
      %s18 = sshll.u32 [#allocation3], 4
      %s19 = int_to_ptr.vmem [resolvable:$true] %s18
      %21 = dma.hbm_to_vmem [thread:$0]  %s0, 128, %s19, [#allocation4]
    $region5: #{tpu_custom_call.1} parent=1 // pred_fallthru
      _
    // Predicated region
    $region6: #{tpu_custom_call.1} parent=1 // pred_check
      _
    $region7: #{tpu_custom_call.1} parent=1 // pred_check_branch
      %23 = sbr.rel (0) target = $region9
    $region8: #{tpu_custom_call.1} parent=1 // pred_region
      %s25 = ssub.s32 256, 256
      %26 = vsyncadd [#allocation7], %s25
      %s27 = sshll.u32 [#allocation6], 4
      %s28 = int_to_ptr.vmem [resolvable:$true] %s27
      %33 = dma.hbm_to_vmem [thread:$0]  %s1, 256, %s28, [#allocation7], 128, 128, 8
    $region9: #{tpu_custom_call.1} parent=1 // pred_fallthru
      _
    // Predicated region
    $region10: #{tpu_custom_call.1} parent=1 // pred_check
      _
    $region11: #{tpu_custom_call.1} parent=1 // pred_check_branch
      %35 = sbr.rel (0) target = $region13
    $region12: #{tpu_custom_call.1} parent=1 // pred_region
      _
    $region13: #{tpu_custom_call.1} parent=1 // pred_fallthru
      _
    // Predicated region
    $region14: #{tpu_custom_call.1} parent=1 // pred_check
      _
    $region15: #{tpu_custom_call.1} parent=1 // pred_check_branch
      %37 = sbr.rel (0) target = $region17
    $region16: #{tpu_custom_call.1} parent=1 // pred_region
      _
    $region17: #{tpu_custom_call.1} parent=1 // pred_fallthru
      _
    // Predicated region
    $region18: #{tpu_custom_call.1} parent=1 // pred_check
      _
    $region19: #{tpu_custom_call.1} parent=1 // pred_check_branch
      %39 = sbr.rel (0) target = $region21
    $region20: #{tpu_custom_call.1} parent=1 // pred_region
      %40 = dma.done [#allocation4], 128
    $region21: #{tpu_custom_call.1} parent=1 // pred_fallthru
      _
    // Predicated region
    $region22: #{tpu_custom_call.1} parent=1 // pred_check
      _
    $region23: #{tpu_custom_call.1} parent=1 // pred_check_branch
      %42 = sbr.rel (0) target = $region25
    $region24: #{tpu_custom_call.1} parent=1 // pred_region
      %43 = dma.done [#allocation7], 256
    $region25: #{tpu_custom_call.1} parent=1 // pred_fallthru
      _
    %p44 = scmp.eq.s32.totalorder 0, 0
    // Predicated region
    $region26: #{tpu_custom_call.1} parent=1 // pred_check
      %p45 = pneg %p44
    $region27: #{tpu_custom_call.1} parent=1 // pred_check_branch
      %47 = sbr.rel (%p45) target = $region29
    $region28: #{tpu_custom_call.1} parent=1 // pred_region
      %vm48 = vcmask 122880
      %49 = vst.msk [vmem:[#allocation2] sm:$0x1] %vm48, 0.0
    $region29: #{tpu_custom_call.1} parent=1 // pred_fallthru
      _
    %v50 = vld [vmem:[#allocation3] sm:$0xff]
    %v51 = vld [vmem:[#allocation6] sm:$0xff]
    %v52 = vld [vmem:[#allocation6 + $0x8] sm:$0xff]
    %vm53 = vcmask 130048
    %v55 = vsel %vm53, %v50, 0
    %57 = vmatprep.subr.mxu0 0.0
    %58 = vmatpush1.msra.mxu0 %v51
    %59 = vmatprep.subr.mxu0 0.0
    %60 = vmatpush1.msra.mxu0 %v52
    %61 = vmatprep.subr.mxu0 0.0
    %62 = vmatpush1.msra.mxu0 0.0
    %63 = vmatprep.subr.mxu0 0.0
    %64 = vmatpush1.msra.mxu0 0.0
    %65 = vmatprep.subr.mxu0 0.0
    %66 = vmatpush1.msra.mxu0 0.0
    %67 = vmatprep.subr.mxu0 0.0
    %68 = vmatpush1.msra.mxu0 0.0
    %69 = vmatprep.subr.mxu0 0.0
    %70 = vmatpush1.msra.mxu0 0.0
    %71 = vmatprep.subr.mxu0 0.0
    %72 = vmatpush1.msra.mxu0 0.0
    %73 = vmatprep.subr.mxu0 0.0
    %74 = vmatpush1.msra.mxu0 0.0
    %75 = vmatprep.subr.mxu0 0.0
    %76 = vmatpush1.msra.mxu0 0.0
    %77 = vmatprep.subr.mxu0 0.0
    %78 = vmatpush1.msra.mxu0 0.0
    %79 = vmatprep.subr.mxu0 0.0
    %80 = vmatpush1.msra.mxu0 0.0
    %81 = vmatprep.subr.mxu0 0.0
    %82 = vmatpush1.msra.mxu0 0.0
    %83 = vmatprep.subr.mxu0 0.0
    %84 = vmatpush1.msra.mxu0 0.0
    %85 = vmatprep.subr.mxu0 0.0
    %86 = vmatpush1.msra.mxu0 0.0
    %87 = vmatprep.subr.mxu0 0.0
    %88 = vmatpush1.msra.mxu0 0.0
    %89 = vmatprep.subr.mxu0 0.0
    %90 = vmatpush1.msra.mxu0 0.0
    %91 = vmatprep.subr.mxu0 0.0
    %92 = vmatpush1.msra.mxu0 0.0
    %93 = vmatprep.subr.mxu0 0.0
    %94 = vmatpush1.msra.mxu0 0.0
    %95 = vmatprep.subr.mxu0 0.0
    %96 = vmatpush1.msra.mxu0 0.0
    %97 = vmatprep.subr.mxu0 0.0
    %98 = vmatpush1.msra.mxu0 0.0
    %99 = vmatprep.subr.mxu0 0.0
    %100 = vmatpush1.msra.mxu0 0.0
    %101 = vmatprep.subr.mxu0 0.0
    %102 = vmatpush1.msra.mxu0 0.0
    %103 = vmatprep.subr.mxu0 0.0
    %104 = vmatpush1.msra.mxu0 0.0
    %105 = vmatprep.subr.mxu0 0.0
    %106 = vmatpush1.msra.mxu0 0.0
    %107 = vmatprep.subr.mxu0 0.0
    %108 = vmatpush1.msra.mxu0 0.0
    %109 = vmatprep.subr.mxu0 0.0
    %110 = vmatpush1.msra.mxu0 0.0
    %111 = vmatprep.subr.mxu0 0.0
    %112 = vmatpush1.msra.mxu0 0.0
    %113 = vmatprep.subr.mxu0 0.0
    %114 = vmatpush1.msra.mxu0 0.0
    %115 = vmatprep.subr.mxu0 0.0
    %116 = vmatpush1.msra.mxu0 0.0
    %117 = vmatprep.subr.mxu0 0.0
    %118 = vmatpush1.msra.mxu0 0.0
    %119 = vmatprep.subr.mxu0 0.0
    %120 = vmatpush1.msra.mxu0 0.0
    %121 = vmatprep.mubr.f32.mxu0 0.0
    %122 = vmatmul.mubr.f32.gmra.mrb[0].mxu0 %v55
    %v123 = vpop.f32.mrb[0].mxu0
    %v124 = vadd.f32 0.0, %v123
    %v125 = vpop.f32.mrb[0].mxu0
    %126 = vdwg.mxu0
    %s127 = smul.u32 0, 8
    %s128 = scalar_lea.vmem [#allocation8], %s127
    %129 = vst [vmem:[%s128] sm:$0xff] %v124
    %v130 = vld [vmem:[#allocation2] sm:$0x1]
    %v131 = vsel %vm53, %v50, 0.0
    %v132 = vrot.slane %v131, 4
    %v133 = vadd.f32 %v131, %v132
    %v134 = vrot.slane %v133, 2
    %v135 = vadd.f32 %v133, %v134
    %v136 = vrot.slane %v135, 1
    %v137 = vadd.f32 %v135, %v136
    %v138 = vadd.f32 %v130, %v137
    %vm139 = vcmask 122880
    %140 = vst.msk [vmem:[#allocation2] sm:$0x1] %vm139, %v138
    // Predicated region
    $region30: #{tpu_custom_call.1} parent=1 // pred_check
      %p141 = pneg %p44
    $region31: #{tpu_custom_call.1} parent=1 // pred_check_branch
      %143 = sbr.rel (%p141) target = $region33
    $region32: #{tpu_custom_call.1} parent=1 // pred_region
      %v144 = vld [vmem:[#allocation2] sm:$0x1]
      %v146 = vsel %vm53, %v144, 0
      %148 = vmatprep.subr.mxu0 0.0
      %149 = vmatpush1.msra.mxu0 %v51
      %150 = vmatprep.subr.mxu0 0.0
      %151 = vmatpush1.msra.mxu0 %v52
      %152 = vmatprep.subr.mxu0 0.0
      %153 = vmatpush1.msra.mxu0 0.0
      %154 = vmatprep.subr.mxu0 0.0
      %155 = vmatpush1.msra.mxu0 0.0
      %156 = vmatprep.subr.mxu0 0.0
      %157 = vmatpush1.msra.mxu0 0.0
      %158 = vmatprep.subr.mxu0 0.0
      %159 = vmatpush1.msra.mxu0 0.0
      %160 = vmatprep.subr.mxu0 0.0
      %161 = vmatpush1.msra.mxu0 0.0
      %162 = vmatprep.subr.mxu0 0.0
      %163 = vmatpush1.msra.mxu0 0.0
      %164 = vmatprep.subr.mxu0 0.0
      %165 = vmatpush1.msra.mxu0 0.0
      %166 = vmatprep.subr.mxu0 0.0
      %167 = vmatpush1.msra.mxu0 0.0
      %168 = vmatprep.subr.mxu0 0.0
      %169 = vmatpush1.msra.mxu0 0.0
      %170 = vmatprep.subr.mxu0 0.0
      %171 = vmatpush1.msra.mxu0 0.0
      %172 = vmatprep.subr.mxu0 0.0
      %173 = vmatpush1.msra.mxu0 0.0
      %174 = vmatprep.subr.mxu0 0.0
      %175 = vmatpush1.msra.mxu0 0.0
      %176 = vmatprep.subr.mxu0 0.0
      %177 = vmatpush1.msra.mxu0 0.0
      %178 = vmatprep.subr.mxu0 0.0
      %179 = vmatpush1.msra.mxu0 0.0
      %180 = vmatprep.subr.mxu0 0.0
      %181 = vmatpush1.msra.mxu0 0.0
      %182 = vmatprep.subr.mxu0 0.0
      %183 = vmatpush1.msra.mxu0 0.0
      %184 = vmatprep.subr.mxu0 0.0
      %185 = vmatpush1.msra.mxu0 0.0
      %186 = vmatprep.subr.mxu0 0.0
      %187 = vmatpush1.msra.mxu0 0.0
      %188 = vmatprep.subr.mxu0 0.0
      %189 = vmatpush1.msra.mxu0 0.0
      %190 = vmatprep.subr.mxu0 0.0
      %191 = vmatpush1.msra.mxu0 0.0
      %192 = vmatprep.subr.mxu0 0.0
      %193 = vmatpush1.msra.mxu0 0.0
      %194 = vmatprep.subr.mxu0 0.0
      %195 = vmatpush1.msra.mxu0 0.0
      %196 = vmatprep.subr.mxu0 0.0
      %197 = vmatpush1.msra.mxu0 0.0
      %198 = vmatprep.subr.mxu0 0.0
      %199 = vmatpush1.msra.mxu0 0.0
      %200 = vmatprep.subr.mxu0 0.0
      %201 = vmatpush1.msra.mxu0 0.0
      %202 = vmatprep.subr.mxu0 0.0
      %203 = vmatpush1.msra.mxu0 0.0
      %204 = vmatprep.subr.mxu0 0.0
      %205 = vmatpush1.msra.mxu0 0.0
      %206 = vmatprep.subr.mxu0 0.0
      %207 = vmatpush1.msra.mxu0 0.0
      %208 = vmatprep.subr.mxu0 0.0
      %209 = vmatpush1.msra.mxu0 0.0
      %210 = vmatprep.subr.mxu0 0.0
      %211 = vmatpush1.msra.mxu0 0.0
      %212 = vmatprep.mubr.f32.mxu0 0.0
      %213 = vmatmul.mubr.f32.gmra.mrb[0].mxu0 %v146
      %v214 = vpop.f32.mrb[0].mxu0
      %v215 = vadd.f32 0.0, %v214
      %v216 = vpop.f32.mrb[0].mxu0
      %217 = vdwg.mxu0
      %v218 = vmul.f32 %v215, 0.125
      %v219 = vld [vmem:[#allocation8] sm:$0xff]
      %v220 = vlaneseq
      %v221 = vshrl.u32 %v220, 7
      %v222 = vsub.s32 0, %v221
      %v223 = vrot.slane %v218, %v222
      %v224 = vsub.f32 %v219, %v223
      %v225 = vmul.f32 %v224, %v224
      %v226 = vrot.slane %v225, 4
      %v227 = vadd.f32 %v225, %v226
      %v228 = vrot.slane %v227, 2
      %v229 = vadd.f32 %v227, %v228
      %v230 = vrot.slane %v229, 1
      %v231 = vadd.f32 %v229, %v230
      %v232 = vadd.f32 %v231, 0.0
      %v233 = vmul.f32 %v218, 0.0
      %v234 = vmul.f32 %v233, %v218
      %v235 = vsub.f32 %v232, %v234
      %v236 = vmul.f32 %v235, 0.125
      %v237 = vmax.f32 %v236, 0.0
      %v238 = vld [vmem:[%s2] sm:$0x1]
      %v239 = vadd.f32 %v237, 1e-05
      %v240 = vrsqrt.pop %v239
      %v241 = vmul.f32 %v238, %v240
      %v242 = vld [vmem:[%s3] sm:$0x1]
      %v243 = vmul.f32 %v218, %v241
      %v244 = vsub.f32 %v242, %v243
      %v246 = vlaneseq
      %v247 = vshrl.u32 %v246, 7
      %v248 = vsub.s32 0, %v247
      %v249 = vrot.slane %v241, %v248
      %v251 = vmul.f32 %v219, %v249
      %v253 = vlaneseq
      %v254 = vshrl.u32 %v253, 7
      %v255 = vsub.s32 0, %v254
      %v256 = vrot.slane %v244, %v255
      %v258 = vadd.f32 %v251, %v256
      %259 = vst [vmem:[#allocation8] sm:$0xff] %v258
    $region33: #{tpu_custom_call.1} parent=1 // pred_fallthru
      _
    // Predicated region
    $region34: #{tpu_custom_call.1} parent=1 // pred_check
      _
    $region35: #{tpu_custom_call.1} parent=1 // pred_check_branch
      %261 = sbr.rel (0) target = $region37
    $region36: #{tpu_custom_call.1} parent=1 // pred_region
      %s263 = ssub.s32 128, 128
      %264 = vsyncadd [#allocation5], %s263
      %s266 = sshll.u32 [#allocation8], 4
      %s267 = int_to_ptr.vmem [resolvable:$true] %s266
      %269 = dma.vmem_to_hbm [thread:$0]  %s267, 128, %s4, [#allocation5]
    $region37: #{tpu_custom_call.1} parent=1 // pred_fallthru
      _
    // Predicated region
    $region38: #{tpu_custom_call.1} parent=1 // pred_check
      _
    $region39: #{tpu_custom_call.1} parent=1 // pred_check_branch
      %271 = sbr.rel (0) target = $region41
    $region40: #{tpu_custom_call.1} parent=1 // pred_region
      %272 = dma.done [#allocation5], 128
    $region41: #{tpu_custom_call.1} parent=1 // pred_fallthru
      _
    %273 = vsyncpa [#allocation4], 1
    %274 = vsyncpa [#allocation7], 1
    %275 = vsyncpa [#allocation5], 1

</llo_original>
